<compile_context>
chip_gen: v7x
topology: tpu7x:2x2x1
jax: 0.10.0
libtpu: 0.0.40
codegen_flags: <defaults>
</compile_context>

<pallas_src>
import functools

import jax
import jax.numpy as jnp
from jax.experimental import pallas as pl
from jax.experimental.pallas import tpu as pltpu


# ----------------------------- kernel ---------------------------------------

def _qnet_kernel(n_hidden, *refs):
    """Fused forward for one batch tile.

    refs layout (all VMEM):
      state_tile,
      [W_i, b_i] * n_hidden        (net_state layers that are followed by ReLU)
      W_head, b_head               (last net_state Linear + dueling heads + re-norm, fused)
      out_tile                     (lane-padded to a 128 multiple)
    """
    it = iter(refs)
    state_ref = next(it)
    hidden = [(next(it), next(it)) for _ in range(n_hidden)]
    wh_ref, bh_ref = next(it), next(it)
    out_ref = next(it)

    x = state_ref[...]                                   # f32 [TB, state_dim]
    for w_ref, b_ref in hidden:
        # MXU in the weights' dtype (bf16 by default), accumulate in f32.
        x = jnp.dot(x.astype(w_ref.dtype), w_ref[...],
                    preferred_element_type=jnp.float32) + b_ref[...]
        x = jnp.maximum(x, 0.0)                          # bias/ReLU in f32

    out_ref[...] = jnp.dot(x.astype(wh_ref.dtype), wh_ref[...],
                           preferred_element_type=jnp.float32) + bh_ref[...]


# ----------------------------- host-side folding -----------------------------

def _pad2(x, rows, cols):
    r, c = x.shape
    if (r, c) == (rows, cols):
        return x
    return jnp.zeros((rows, cols), x.dtype).at[:r, :c].set(x)


def _round_up(n, m):
    return ((n + m - 1) // m) * m


def _prepare_fused_params(params, *, lane_pad=128, use_bf16=True):
    """Fold norm / dueling centering / value re-norm / last Linear into weights,
    then lane-pad everything to 128-multiples and cast matmul weights to bf16."""
    f32 = jnp.float32
    net_state = [(w.astype(f32), b.astype(f32)) for (w, b) in params["net_state"]]
    state_dim = net_state[0][0].shape[0]

    # (1) fold state normalization into layer 0.
    w0, b0 = net_state[0]
    std = params["state_std"].reshape(1, -1)
    avg = params["state_avg"].reshape(1, -1)
    net_state[0] = (w0 / std.reshape(-1, 1), b0 - (avg / std) @ w0)

    # (2) fold dueling centering + adv broadcast + value re-norm into one head.
    action_dim = params["val1_w"].shape[1]
    vstd = params["value_std"].reshape(())
    vavg = params["value_avg"].reshape(())
    center = (jnp.eye(action_dim, dtype=f32)
              - jnp.full((action_dim, action_dim), 1.0 / action_dim, f32))
    ones_row = jnp.ones((1, action_dim), f32)
    w_head = (params["val1_w"] @ center + params["adv1_w"] @ ones_row) * vstd
    b_head = (params["val1_b"] @ center + params["adv1_b"] @ ones_row) * vstd + vavg

    # (3) collapse the final net_state Linear (activation-free per build_mlp
    #     if_raw_out=True) into the head.
    w_last, b_last = net_state[-1]
    b_head = b_last @ w_head + b_head
    w_head = w_last @ w_head
    hidden = net_state[:-1]          # every remaining layer is followed by ReLU

    # (4) lane-pad output dims to 128 multiples; cast matmul weights to bf16.
    wdt = jnp.bfloat16 if use_bf16 else f32
    padded_hidden = []
    in_dim = state_dim               # state is fed unpadded (full-extent block)
    for (w, b) in hidden:
        d_out_p = _round_up(w.shape[1], lane_pad)
        padded_hidden.append((_pad2(w, in_dim, d_out_p).astype(wdt),
                              _pad2(b, 1, d_out_p)))
        in_dim = d_out_p

    a_pad = _round_up(w_head.shape[1], lane_pad)
    w_head_p = _pad2(w_head, in_dim, a_pad).astype(wdt)
    b_head_p = _pad2(b_head, 1, a_pad)
    return padded_hidden, w_head_p, b_head_p, action_dim, a_pad


def _pick_batch_tile(batch):
    """Single tile for small batches; otherwise largest 8-aligned divisor."""
    if batch <= 1024:
        return batch
    for tb in range(1024, 7, -8):
        if batch % tb == 0:
            return tb
    return batch  # ragged large batch: single tile (VMEM limit raised below)


# ----------------------------- wrapper ---------------------------------------

def qnet_twin_duel_forward(state, params, *, batch_tile=None, use_bf16=True):
    hidden, w_head, b_head, action_dim, a_pad = _prepare_fused_params(
        params, use_bf16=use_bf16)

    state = state.astype(jnp.float32)
    batch, state_dim = state.shape
    n_hidden = len(hidden)

    tb = batch_tile if batch_tile is not None else _pick_batch_tile(batch)
    assert batch % tb == 0, "batch tile must divide batch"
    grid = (batch // tb,)
    # TODO(synk): on v7x, when batch is large/compute-bound, force >=2 grid
    # steps so dimension_semantics=("parallel",) shards across both TCs.

    # Inputs: batch-tiled state, then VMEM-resident weights (constant index_map).
    flat_inputs = [state]
    in_specs = [pl.BlockSpec((tb, state_dim), lambda i: (i, 0))]
    for (w, b) in hidden:
        flat_inputs += [w, b]
        in_specs += [pl.BlockSpec(w.shape, lambda i: (0, 0)),
                     pl.BlockSpec(b.shape, lambda i: (0, 0))]
    flat_inputs += [w_head, b_head]
    in_specs += [pl.BlockSpec(w_head.shape, lambda i: (0, 0)),
                 pl.BlockSpec(b_head.shape, lambda i: (0, 0))]

    # Cost estimate for XLA's scheduler.
    flops = sum(2 * batch * w.shape[0] * w.shape[1] for (w, _) in hidden)
    flops += 2 * batch * w_head.shape[0] * w_head.shape[1]
    weight_bytes = sum(int(a.nbytes) for a in flat_inputs[1:])
    bytes_accessed = int(state.nbytes) + weight_bytes + batch * a_pad * 4
    cost = pl.CostEstimate(flops=int(flops), transcendentals=0,
                           bytes_accessed=int(bytes_accessed))

    # VMEM budget: raise the scoped limit only if we exceed the v5e default.
    max_width = max([a_pad] + [w.shape[1] for (w, _) in hidden])
    needed = (2 * (tb * state_dim * 4 + tb * a_pad * 4)   # double-buffered I/O tiles
              + 2 * weight_bytes                           # resident weights (dbl-buffered)
              + 3 * tb * max_width * 4                     # activation temporaries
              + (2 << 20))
    cp_kwargs = dict(dimension_semantics=("parallel",))
    if needed > (16 << 20):
        cp_kwargs["vmem_limit_bytes"] = int(min(needed, 100 << 20))

    out_padded = pl.pallas_call(
        functools.partial(_qnet_kernel, n_hidden),
        out_shape=jax.ShapeDtypeStruct((batch, a_pad), jnp.float32),
        grid=grid,
        in_specs=in_specs,
        out_specs=pl.BlockSpec((tb, a_pad), lambda i: (i, 0)),
        compiler_params=pltpu.CompilerParams(**cp_kwargs),
        cost_estimate=cost,
    )(*flat_inputs)

    return out_padded[:, :action_dim]


# ---------------- deterministic parameter construction ----------------------

def _orthogonal(key, shape, scale):
    """Row-orthonormal init matching torch.nn.init.orthogonal_ semantics."""
    rows, cols = shape
    a = jax.random.normal(key, (max(rows, cols), min(rows, cols)), jnp.float32)
    q, r = jnp.linalg.qr(a)
    q = q * jnp.sign(jnp.diagonal(r))
    if rows < cols:
        q = q.T
    return (scale * q[:rows, :cols]).astype(jnp.float32)


def _torch_linear_init(key, fan_in, fan_out):
    """PyTorch default Linear init: U(-1/sqrt(fan_in), 1/sqrt(fan_in))."""
    kw, kb = jax.random.split(key)
    bound = 1.0 / jnp.sqrt(fan_in)
    w = jax.random.uniform(kw, (fan_in, fan_out), jnp.float32, -bound, bound)
    b = jax.random.uniform(kb, (1, fan_out), jnp.float32, -bound, bound)
    return w, b


def make_params(key, state_dim, action_dim, dims):
    keys = jax.random.split(key, len(dims) + 4)

    net_state = []
    sizes = [state_dim, *dims]
    for i in range(len(sizes) - 1):
        net_state.append(_torch_linear_init(keys[i], sizes[i], sizes[i + 1]))

    val1_w = _orthogonal(keys[-4], (action_dim, dims[-1]), 0.1).T
    val1_b = jnp.full((1, action_dim), 1e-6, jnp.float32)
    adv1_w = _orthogonal(keys[-3], (1, dims[-1]), 0.1).T
    adv1_b = jnp.full((1, 1), 1e-6, jnp.float32)

    return {
        "state_avg": jnp.zeros((1, state_dim), jnp.float32),
        "state_std": jnp.ones((1, state_dim), jnp.float32),
        "value_avg": jnp.zeros((1, 1), jnp.float32),
        "value_std": jnp.ones((1, 1), jnp.float32),
        "net_state": net_state,
        "val1_w": val1_w, "val1_b": val1_b,
        "adv1_w": adv1_w, "adv1_b": adv1_b,
    }


def reference_forward(state, params):
    """Pure-JAX reference of the original (unfused) forward pass."""
    x = (state - params["state_avg"]) / params["state_std"]
    n = len(params["net_state"])
    for i, (w, b) in enumerate(params["net_state"]):
        x = x @ w + b
        if i != n - 1:
            x = jnp.maximum(x, 0.0)
    q_val = x @ params["val1_w"] + params["val1_b"]
    q_adv = x @ params["adv1_w"] + params["adv1_b"]
    value = q_val - jnp.mean(q_val, axis=1, keepdims=True) + q_adv
    return value * params["value_std"] + params["value_avg"]


if __name__ == "__main__":
    key = jax.random.PRNGKey(0)
    k_param, k_state = jax.random.split(key)

    batch = 16
    state_dim = 16
    action_dim = 4
    dims = (32, 32)

    params = make_params(k_param, state_dim, action_dim, dims)
    # perturb norm stats so the host-side folding is actually exercised
    params["state_avg"] = 0.1 * jax.random.normal(
        jax.random.PRNGKey(1), (1, state_dim), jnp.float32)
    params["state_std"] = 1.0 + 0.1 * jax.random.uniform(
        jax.random.PRNGKey(2), (1, state_dim), jnp.float32)
    params["value_avg"] = jnp.full((1, 1), 0.05, jnp.float32)
    params["value_std"] = jnp.full((1, 1), 1.5, jnp.float32)

    state = jax.random.normal(k_state, (batch, state_dim), jnp.float32)
    ref = reference_forward(state, params)

    # f32 path: validates the host-side weight folding algebra tightly.
    out_f32 = jax.block_until_ready(
        qnet_twin_duel_forward(state, params, use_bf16=False))
    assert out_f32.shape == (batch, action_dim)
    assert jnp.allclose(out_f32, ref, atol=1e-4, rtol=1e-3), (out_f32, ref)

    # bf16 MXU path (default): looser tolerance for bf16 operand rounding.
    out = jax.block_until_ready(qnet_twin_duel_forward(state, params))
    assert out.shape == (batch, action_dim)
    assert jnp.allclose(out, ref, atol=1e-2, rtol=1e-2), (out, ref)

    print("KERNEL_OK")
</pallas_src>

<mosaic_0001>
module attributes {stable_mosaic.version = 11 : i64} {
  func.func @_qnet_kernel(%arg0: i32, %arg1: memref<16x16xf32, #tpu.memory_space<vmem>>, %arg2: memref<16x128xf32, #tpu.memory_space<vmem>>, %arg3: memref<1x128xf32, #tpu.memory_space<vmem>>, %arg4: memref<128x128xf32, #tpu.memory_space<vmem>>, %arg5: memref<1x128xf32, #tpu.memory_space<vmem>>, %arg6: memref<16x128xf32, #tpu.memory_space<vmem>>) attributes {dimension_semantics = [#tpu.dimension_semantics<parallel>], iteration_bounds = array<i64: 1>, scalar_prefetch = 0 : i64, scratch_operands = 0 : i64, tpu.core_type = #tpu.core_type<tc>, window_params = [{transform_indices = @transform_0, window_bounds = array<i64: 16, 16>}, {pipeline_mode = #tpu.pipeline_mode<synchronous>, transform_indices = @transform_1, window_bounds = array<i64: 16, 128>}, {pipeline_mode = #tpu.pipeline_mode<synchronous>, transform_indices = @transform_2, window_bounds = array<i64: 1, 128>}, {pipeline_mode = #tpu.pipeline_mode<synchronous>, transform_indices = @transform_3, window_bounds = array<i64: 128, 128>}, {pipeline_mode = #tpu.pipeline_mode<synchronous>, transform_indices = @transform_4, window_bounds = array<i64: 1, 128>}, {transform_indices = @transform_5, window_bounds = array<i64: 16, 128>}]} {
    %c0 = arith.constant 0 : index
    %c0_0 = arith.constant 0 : index
    %0 = vector.load %arg1[%c0, %c0_0] : memref<16x16xf32, #tpu.memory_space<vmem>>, vector<16x16xf32>
    %c0_1 = arith.constant 0 : index
    %c0_2 = arith.constant 0 : index
    %1 = vector.load %arg2[%c0_1, %c0_2] : memref<16x128xf32, #tpu.memory_space<vmem>>, vector<16x128xf32>
    %cst = arith.constant dense<0.000000e+00> : vector<16x128xf32>
    %2 = tpu.matmul %0, %1, %cst {dimension_numbers = #tpu.dot_dimension_numbers<[1], [0], [0], [1], [0, 0, 1, 1], [], []>} : vector<16x16xf32>, vector<16x128xf32>, vector<16x128xf32> -> vector<16x128xf32>
    %c0_3 = arith.constant 0 : index
    %c0_4 = arith.constant 0 : index
    %3 = vector.load %arg3[%c0_3, %c0_4] : memref<1x128xf32, #tpu.memory_space<vmem>>, vector<1x128xf32>
    %4 = vector.broadcast %3 : vector<1x128xf32> to vector<16x128xf32>
    %5 = arith.addf %2, %4 : vector<16x128xf32>
    %cst_5 = arith.constant 0.000000e+00 : f32
    %6 = vector.broadcast %cst_5 : f32 to vector<16x128xf32>
    %7 = arith.maximumf %5, %6 : vector<16x128xf32>
    %c0_6 = arith.constant 0 : index
    %c0_7 = arith.constant 0 : index
    %8 = vector.load %arg4[%c0_6, %c0_7] : memref<128x128xf32, #tpu.memory_space<vmem>>, vector<128x128xf32>
    %cst_8 = arith.constant dense<0.000000e+00> : vector<16x128xf32>
    %9 = tpu.matmul %7, %8, %cst_8 {dimension_numbers = #tpu.dot_dimension_numbers<[1], [0], [0], [1], [0, 0, 1, 1], [], []>} : vector<16x128xf32>, vector<128x128xf32>, vector<16x128xf32> -> vector<16x128xf32>
    %c0_9 = arith.constant 0 : index
    %c0_10 = arith.constant 0 : index
    %10 = vector.load %arg5[%c0_9, %c0_10] : memref<1x128xf32, #tpu.memory_space<vmem>>, vector<1x128xf32>
    %11 = vector.broadcast %10 : vector<1x128xf32> to vector<16x128xf32>
    %12 = arith.addf %9, %11 : vector<16x128xf32>
    %c0_11 = arith.constant 0 : index
    %c0_12 = arith.constant 0 : index
    %13 = vector.load %arg6[%c0_11, %c0_12] : memref<16x128xf32, #tpu.memory_space<vmem>>, vector<16x128xf32>
    tpu.vector_store %arg6[%c0_11, %c0_12], %12 {strides = array<i32>} : memref<16x128xf32, #tpu.memory_space<vmem>>, vector<16x128xf32>,
    return
  }
  func.func @transform_0(%arg0: i32) -> (i32, i32) {
    %c0_i32 = arith.constant 0 : i32
    %c0_i32_0 = arith.constant 0 : i32
    return %arg0, %c0_i32 : i32, i32
  }
  func.func @transform_1(%arg0: i32) -> (i32, i32) {
    %c0_i32 = arith.constant 0 : i32
    %c0_i32_0 = arith.constant 0 : i32
    %c0_i32_1 = arith.constant 0 : i32
    return %c0_i32, %c0_i32_0 : i32, i32
  }
  func.func @transform_2(%arg0: i32) -> (i32, i32) {
    %c0_i32 = arith.constant 0 : i32
    %c0_i32_0 = arith.constant 0 : i32
    %c0_i32_1 = arith.constant 0 : i32
    return %c0_i32, %c0_i32_0 : i32, i32
  }
  func.func @transform_3(%arg0: i32) -> (i32, i32) {
    %c0_i32 = arith.constant 0 : i32
    %c0_i32_0 = arith.constant 0 : i32
    %c0_i32_1 = arith.constant 0 : i32
    return %c0_i32, %c0_i32_0 : i32, i32
  }
  func.func @transform_4(%arg0: i32) -> (i32, i32) {
    %c0_i32 = arith.constant 0 : i32
    %c0_i32_0 = arith.constant 0 : i32
    %c0_i32_1 = arith.constant 0 : i32
    return %c0_i32, %c0_i32_0 : i32, i32
  }
  func.func @transform_5(%arg0: i32) -> (i32, i32) {
    %c0_i32 = arith.constant 0 : i32
    %c0_i32_0 = arith.constant 0 : i32
    return %arg0, %c0_i32 : i32, i32
  }
}

</mosaic_0001>

<llo_original>
// kernel: tpu_custom_call.1
$region0: #{tpu_custom_call.1}
  #allocation0 [shape = 'u32[]', space=smem, size = 0x4, offset = 0x4, fixed_abs, tag = 'smem constant byte address 0x4 - core index']
  #allocation1 [shape = 'u32[144,128]{1,0:T(1,128)}', space=vmem, size = 0x12000, scoped, tag = 'internal scratch']
  %s0 = inlined_call_operand.hbm [shape: f32[16,16], index: 0, kind: input, shape index: {}]
  %s1 = inlined_call_operand.hbm [shape: f32[16,128], index: 1, kind: input, shape index: {}]
  %s2 = inlined_call_operand.vmem [shape: f32[1,128], index: 2, kind: input, shape index: {}]
  %s3 = inlined_call_operand.hbm [shape: f32[128,128], index: 3, kind: input, shape index: {}]
  %s4 = inlined_call_operand.vmem [shape: f32[1,128], index: 4, kind: input, shape index: {}]
  %s5 = inlined_call_operand.hbm [shape: f32[16,128], index: 5, kind: output, shape index: {}]
  %s6 = sld [smem:[#allocation0]]
  $region42: #{tpu_custom_call.1} parent=0
    _
  %s8 = ssub.s32 1, %s6
  %s9 = scalar_select 0, %s8, %s6
  $region1: #{tpu_custom_call.1} parent=0
    #allocation2 [shape = 'u8[8192]{0}', space=vmem, size = 0x2000, scoped, tag = 'input window, operand 0, single buffered']
    #allocation3 [shape = 's32[1]{0}', space=sflag, size = 0x4, scoped, tag = 'scoped memory for tpu_custom_call.1']
    #allocation4 [shape = 's32[1]{0}', space=sflag, size = 0x4, scoped, tag = 'scoped memory for tpu_custom_call.1']
    #allocation5 [shape = 'u8[8192]{0}', space=vmem, size = 0x2000, scoped, tag = 'input window, operand 1, single buffered']
    #allocation6 [shape = 's32[1]{0}', space=sflag, size = 0x4, scoped, tag = 'scoped memory for tpu_custom_call.1']
    #allocation7 [shape = 'u8[65536]{0}', space=vmem, size = 0x10000, scoped, tag = 'input window, operand 3, single buffered']
    #allocation8 [shape = 'u8[8192]{0}', space=vmem, size = 0x2000, scoped, tag = 'output window, operand 0, single buffered']
    %10 = vsyncpa [#allocation3], 0
    %11 = vsyncpa [#allocation6], 0
    %12 = vsyncpa [#allocation4], 0
    // Predicated region
    $region2: #{tpu_custom_call.1} parent=1 // pred_check
      _
    $region3: #{tpu_custom_call.1} parent=1 // pred_check_branch
      %14 = sbr.rel (0) target = $region5
    $region4: #{tpu_custom_call.1} parent=1 // pred_region
      %s16 = ssub.s32 256, 256
      %17 = vsyncadd [#allocation3], %s16
      %s18 = sshll.u32 [#allocation2], 4
      %s19 = int_to_ptr.vmem [resolvable:$true] %s18
      %24 = dma.hbm_to_vmem [thread:$0]  %s0, 256, %s19, [#allocation3], 128, 128, 8
    $region5: #{tpu_custom_call.1} parent=1 // pred_fallthru
      _
    // Predicated region
    $region6: #{tpu_custom_call.1} parent=1 // pred_check
      _
    $region7: #{tpu_custom_call.1} parent=1 // pred_check_branch
      %26 = sbr.rel (0) target = $region9
    $region8: #{tpu_custom_call.1} parent=1 // pred_region
      %s28 = ssub.s32 256, 256
      %29 = vsyncadd [#allocation6], %s28
      %s30 = sshll.u32 [#allocation5], 4
      %s31 = int_to_ptr.vmem [resolvable:$true] %s30
      %36 = dma.hbm_to_vmem [thread:$0]  %s1, 256, %s31, [#allocation6], 128, 128, 8
    $region9: #{tpu_custom_call.1} parent=1 // pred_fallthru
      _
    // Predicated region
    $region10: #{tpu_custom_call.1} parent=1 // pred_check
      _
    $region11: #{tpu_custom_call.1} parent=1 // pred_check_branch
      %38 = sbr.rel (0) target = $region13
    $region12: #{tpu_custom_call.1} parent=1 // pred_region
      _
    $region13: #{tpu_custom_call.1} parent=1 // pred_fallthru
      _
    // Predicated region
    $region14: #{tpu_custom_call.1} parent=1 // pred_check
      _
    $region15: #{tpu_custom_call.1} parent=1 // pred_check_branch
      %40 = sbr.rel (0) target = $region17
    $region16: #{tpu_custom_call.1} parent=1 // pred_region
      %s42 = ssub.s32 2048, 2048
      %43 = vsyncadd [#allocation6], %s42
      %s44 = sshll.u32 [#allocation7], 4
      %s45 = int_to_ptr.vmem [resolvable:$true] %s44
      %50 = dma.hbm_to_vmem [thread:$0]  %s3, 2048, %s45, [#allocation6], 128, 128, 8
    $region17: #{tpu_custom_call.1} parent=1 // pred_fallthru
      _
    // Predicated region
    $region18: #{tpu_custom_call.1} parent=1 // pred_check
      _
    $region19: #{tpu_custom_call.1} parent=1 // pred_check_branch
      %52 = sbr.rel (0) target = $region21
    $region20: #{tpu_custom_call.1} parent=1 // pred_region
      _
    $region21: #{tpu_custom_call.1} parent=1 // pred_fallthru
      _
    // Predicated region
    $region22: #{tpu_custom_call.1} parent=1 // pred_check
      _
    $region23: #{tpu_custom_call.1} parent=1 // pred_check_branch
      %54 = sbr.rel (0) target = $region25
    $region24: #{tpu_custom_call.1} parent=1 // pred_region
      %55 = dma.done [#allocation3], 256
    $region25: #{tpu_custom_call.1} parent=1 // pred_fallthru
      _
    // Predicated region
    $region26: #{tpu_custom_call.1} parent=1 // pred_check
      _
    $region27: #{tpu_custom_call.1} parent=1 // pred_check_branch
      %57 = sbr.rel (0) target = $region29
    $region28: #{tpu_custom_call.1} parent=1 // pred_region
      %58 = dma.done [#allocation6], 256
    $region29: #{tpu_custom_call.1} parent=1 // pred_fallthru
      _
    // Predicated region
    $region30: #{tpu_custom_call.1} parent=1 // pred_check
      _
    $region31: #{tpu_custom_call.1} parent=1 // pred_check_branch
      %60 = sbr.rel (0) target = $region33
    $region32: #{tpu_custom_call.1} parent=1 // pred_region
      %61 = dma.done [#allocation6], 2048
    $region33: #{tpu_custom_call.1} parent=1 // pred_fallthru
      _
    %v62 = vld [vmem:[#allocation2] sm:$0xff]
    %v63 = vld [vmem:[#allocation2 + $0x8] sm:$0xff]
    %v64 = vld [vmem:[#allocation5] sm:$0xff]
    %v65 = vld [vmem:[#allocation5 + $0x8] sm:$0xff]
    %v66 = vld [vmem:[%s2] sm:$0x1]
    %v68 = vlaneseq
    %v69 = vshrl.u32 %v68, 7
    %v70 = vsub.s32 0, %v69
    %v71 = vrot.slane %v66, %v70
    %vm73 = vcmask 130048
    %v75 = vsel %vm73, %v62, 0
    %v78 = vsel %vm73, %v63, 0
    %80 = vmatprep.subr.mxu0 0.0
    %81 = vmatpush1.msra.mxu0 %v64
    %82 = vmatprep.subr.mxu0 0.0
    %83 = vmatpush1.msra.mxu0 %v65
    %84 = vmatprep.subr.mxu0 0.0
    %85 = vmatpush1.msra.mxu0 0.0
    %86 = vmatprep.subr.mxu0 0.0
    %87 = vmatpush1.msra.mxu0 0.0
    %88 = vmatprep.subr.mxu0 0.0
    %89 = vmatpush1.msra.mxu0 0.0
    %90 = vmatprep.subr.mxu0 0.0
    %91 = vmatpush1.msra.mxu0 0.0
    %92 = vmatprep.subr.mxu0 0.0
    %93 = vmatpush1.msra.mxu0 0.0
    %94 = vmatprep.subr.mxu0 0.0
    %95 = vmatpush1.msra.mxu0 0.0
    %96 = vmatprep.subr.mxu0 0.0
    %97 = vmatpush1.msra.mxu0 0.0
    %98 = vmatprep.subr.mxu0 0.0
    %99 = vmatpush1.msra.mxu0 0.0
    %100 = vmatprep.subr.mxu0 0.0
    %101 = vmatpush1.msra.mxu0 0.0
    %102 = vmatprep.subr.mxu0 0.0
    %103 = vmatpush1.msra.mxu0 0.0
    %104 = vmatprep.subr.mxu0 0.0
    %105 = vmatpush1.msra.mxu0 0.0
    %106 = vmatprep.subr.mxu0 0.0
    %107 = vmatpush1.msra.mxu0 0.0
    %108 = vmatprep.subr.mxu0 0.0
    %109 = vmatpush1.msra.mxu0 0.0
    %110 = vmatprep.subr.mxu0 0.0
    %111 = vmatpush1.msra.mxu0 0.0
    %112 = vmatprep.subr.mxu0 0.0
    %113 = vmatpush1.msra.mxu0 0.0
    %114 = vmatprep.subr.mxu0 0.0
    %115 = vmatpush1.msra.mxu0 0.0
    %116 = vmatprep.subr.mxu0 0.0
    %117 = vmatpush1.msra.mxu0 0.0
    %118 = vmatprep.subr.mxu0 0.0
    %119 = vmatpush1.msra.mxu0 0.0
    %120 = vmatprep.subr.mxu0 0.0
    %121 = vmatpush1.msra.mxu0 0.0
    %122 = vmatprep.subr.mxu0 0.0
    %123 = vmatpush1.msra.mxu0 0.0
    %124 = vmatprep.subr.mxu0 0.0
    %125 = vmatpush1.msra.mxu0 0.0
    %126 = vmatprep.subr.mxu0 0.0
    %127 = vmatpush1.msra.mxu0 0.0
    %128 = vmatprep.subr.mxu0 0.0
    %129 = vmatpush1.msra.mxu0 0.0
    %130 = vmatprep.subr.mxu0 0.0
    %131 = vmatpush1.msra.mxu0 0.0
    %132 = vmatprep.subr.mxu0 0.0
    %133 = vmatpush1.msra.mxu0 0.0
    %134 = vmatprep.subr.mxu0 0.0
    %135 = vmatpush1.msra.mxu0 0.0
    %136 = vmatprep.subr.mxu0 0.0
    %137 = vmatpush1.msra.mxu0 0.0
    %138 = vmatprep.subr.mxu0 0.0
    %139 = vmatpush1.msra.mxu0 0.0
    %140 = vmatprep.subr.mxu0 0.0
    %141 = vmatpush1.msra.mxu0 0.0
    %142 = vmatprep.subr.mxu0 0.0
    %143 = vmatpush1.msra.mxu0 0.0
    %144 = vmatprep.mubr.f32.mxu0 0.0
    %145 = vmatmul.mubr.f32.gmra.mrb[0].mxu0 %v75
    %v146 = vpop.f32.mrb[0].mxu0
    %v147 = vadd.f32 %v71, %v146
    %v148 = vpop.f32.mrb[0].mxu0
    %149 = vmatprep.mubr.f32.mxu0 0.0
    %150 = vmatmul.mubr.f32.gmra.mrb[0].mxu0 %v78
    %v151 = vpop.f32.mrb[0].mxu0
    %v152 = vadd.f32 %v71, %v151
    %v153 = vpop.f32.mrb[0].mxu0
    %154 = vdwg.mxu0
    %v155 = vmax.f32 %v147, 0.0
    %v156 = vmax.f32 %v152, 0.0
    %v157 = vld [vmem:[#allocation7] sm:$0xff]
    %v158 = vld [vmem:[#allocation7 + $0x8] sm:$0xff]
    %v159 = vld [vmem:[#allocation7 + $0x10] sm:$0xff]
    %v160 = vld [vmem:[#allocation7 + $0x18] sm:$0xff]
    %v161 = vld [vmem:[#allocation7 + $0x20] sm:$0xff]
    %v162 = vld [vmem:[#allocation7 + $0x28] sm:$0xff]
    %v163 = vld [vmem:[#allocation7 + $0x30] sm:$0xff]
    %v164 = vld [vmem:[#allocation7 + $0x38] sm:$0xff]
    %v165 = vld [vmem:[#allocation7 + $0x40] sm:$0xff]
    %v166 = vld [vmem:[#allocation7 + $0x48] sm:$0xff]
    %v167 = vld [vmem:[#allocation7 + $0x50] sm:$0xff]
    %v168 = vld [vmem:[#allocation7 + $0x58] sm:$0xff]
    %v169 = vld [vmem:[#allocation7 + $0x60] sm:$0xff]
    %v170 = vld [vmem:[#allocation7 + $0x68] sm:$0xff]
    %v171 = vld [vmem:[#allocation7 + $0x70] sm:$0xff]
    %v172 = vld [vmem:[#allocation7 + $0x78] sm:$0xff]
    %v173 = vld [vmem:[%s4] sm:$0x1]
    %v175 = vlaneseq
    %v176 = vshrl.u32 %v175, 7
    %v177 = vsub.s32 0, %v176
    %v178 = vrot.slane %v173, %v177
    %180 = vmatprep.subr.mxu0 0.0
    %181 = vmatpush1.msra.mxu0 %v157
    %182 = vmatprep.subr.mxu0 0.0
    %183 = vmatpush1.msra.mxu0 %v158
    %184 = vmatprep.subr.mxu0 0.0
    %185 = vmatpush1.msra.mxu0 %v159
    %186 = vmatprep.subr.mxu0 0.0
    %187 = vmatpush1.msra.mxu0 %v160
    %188 = vmatprep.subr.mxu0 0.0
    %189 = vmatpush1.msra.mxu0 %v161
    %190 = vmatprep.subr.mxu0 0.0
    %191 = vmatpush1.msra.mxu0 %v162
    %192 = vmatprep.subr.mxu0 0.0
    %193 = vmatpush1.msra.mxu0 %v163
    %194 = vmatprep.subr.mxu0 0.0
    %195 = vmatpush1.msra.mxu0 %v164
    %196 = vmatprep.subr.mxu0 0.0
    %197 = vmatpush1.msra.mxu0 %v165
    %198 = vmatprep.subr.mxu0 0.0
    %199 = vmatpush1.msra.mxu0 %v166
    %200 = vmatprep.subr.mxu0 0.0
    %201 = vmatpush1.msra.mxu0 %v167
    %202 = vmatprep.subr.mxu0 0.0
    %203 = vmatpush1.msra.mxu0 %v168
    %204 = vmatprep.subr.mxu0 0.0
    %205 = vmatpush1.msra.mxu0 %v169
    %206 = vmatprep.subr.mxu0 0.0
    %207 = vmatpush1.msra.mxu0 %v170
    %208 = vmatprep.subr.mxu0 0.0
    %209 = vmatpush1.msra.mxu0 %v171
    %210 = vmatprep.subr.mxu0 0.0
    %211 = vmatpush1.msra.mxu0 %v172
    %212 = vmatprep.subr.mxu0 0.0
    %213 = vmatpush1.msra.mxu0 0.0
    %214 = vmatprep.subr.mxu0 0.0
    %215 = vmatpush1.msra.mxu0 0.0
    %216 = vmatprep.subr.mxu0 0.0
    %217 = vmatpush1.msra.mxu0 0.0
    %218 = vmatprep.subr.mxu0 0.0
    %219 = vmatpush1.msra.mxu0 0.0
    %220 = vmatprep.subr.mxu0 0.0
    %221 = vmatpush1.msra.mxu0 0.0
    %222 = vmatprep.subr.mxu0 0.0
    %223 = vmatpush1.msra.mxu0 0.0
    %224 = vmatprep.subr.mxu0 0.0
    %225 = vmatpush1.msra.mxu0 0.0
    %226 = vmatprep.subr.mxu0 0.0
    %227 = vmatpush1.msra.mxu0 0.0
    %228 = vmatprep.subr.mxu0 0.0
    %229 = vmatpush1.msra.mxu0 0.0
    %230 = vmatprep.subr.mxu0 0.0
    %231 = vmatpush1.msra.mxu0 0.0
    %232 = vmatprep.subr.mxu0 0.0
    %233 = vmatpush1.msra.mxu0 0.0
    %234 = vmatprep.subr.mxu0 0.0
    %235 = vmatpush1.msra.mxu0 0.0
    %236 = vmatprep.subr.mxu0 0.0
    %237 = vmatpush1.msra.mxu0 0.0
    %238 = vmatprep.subr.mxu0 0.0
    %239 = vmatpush1.msra.mxu0 0.0
    %240 = vmatprep.subr.mxu0 0.0
    %241 = vmatpush1.msra.mxu0 0.0
    %242 = vmatprep.subr.mxu0 0.0
    %243 = vmatpush1.msra.mxu0 0.0
    %244 = vmatprep.mubr.f32.mxu0 0.0
    %245 = vmatmul.mubr.f32.gmra.mrb[0].mxu0 %v155
    %v246 = vpop.f32.mrb[0].mxu0
    %v247 = vadd.f32 %v178, %v246
    %v248 = vpop.f32.mrb[0].mxu0
    %249 = vmatprep.mubr.f32.mxu0 0.0
    %250 = vmatmul.mubr.f32.gmra.mrb[0].mxu0 %v156
    %v251 = vpop.f32.mrb[0].mxu0
    %v252 = vadd.f32 %v178, %v251
    %v253 = vpop.f32.mrb[0].mxu0
    %254 = vdwg.mxu0
    %255 = vst [vmem:[#allocation8] sm:$0xff] %v247
    %256 = vst [vmem:[#allocation8 + $0x8] sm:$0xff] %v252
    // Predicated region
    $region34: #{tpu_custom_call.1} parent=1 // pred_check
      _
    $region35: #{tpu_custom_call.1} parent=1 // pred_check_branch
      %258 = sbr.rel (0) target = $region37
    $region36: #{tpu_custom_call.1} parent=1 // pred_region
      %s260 = ssub.s32 256, 256
      %261 = vsyncadd [#allocation4], %s260
      %s262 = sshll.u32 [#allocation8], 4
      %s263 = int_to_ptr.vmem [resolvable:$true] %s262
      %268 = dma.vmem_to_hbm [thread:$0]  %s263, 256, %s5, [#allocation4], 128, 128, 8
    $region37: #{tpu_custom_call.1} parent=1 // pred_fallthru
      _
    // Predicated region
    $region38: #{tpu_custom_call.1} parent=1 // pred_check
      _
    $region39: #{tpu_custom_call.1} parent=1 // pred_check_branch
      %270 = sbr.rel (0) target = $region41
    $region40: #{tpu_custom_call.1} parent=1 // pred_region
      %271 = dma.done [#allocation4], 256
    $region41: #{tpu_custom_call.1} parent=1 // pred_fallthru
      _
    %272 = vsyncpa [#allocation3], 1
    %273 = vsyncpa [#allocation6], 1
    %274 = vsyncpa [#allocation4], 1

</llo_original>
